<compile_context>
chip_gen: v6e
topology: v6e:2x2x1
jax: 0.10.0
libtpu: 0.0.40
codegen_flags: <defaults>
</compile_context>

<pallas_src>
import functools

import jax
import jax.numpy as jnp
import numpy as np
from jax.experimental import pallas as pl
from jax.experimental.pallas import tpu as pltpu


def head_kernel(h_ref, t_ref, w_ref, b_ref, logits_ref, part_ref, *, total_tokens):
    tm = h_ref.shape[0]

    # ---- hot path: ReLU + Linear on the MXU, f32 accumulate ----
    x = jnp.maximum(h_ref[...], 0)                                    # native dtype (bf16 ok)
    logits = jnp.dot(x, w_ref[...],
                     preferred_element_type=jnp.float32) + b_ref[...]  # (tm, 2) f32
    logits_ref[...] = logits.astype(logits_ref.dtype)

    # ---- masked 2-class cross-entropy, fully reduced in-kernel ----
    # per-token loss = softplus(d) - [class==1] * d,   d = l1 - l0   (column layout (tm, 1))
    d = logits[:, 1:2] - logits[:, 0:1]
    # Rows past the real token count hold undefined data (ragged last block): zero them so
    # possible inf/nan garbage cannot leak into the masked matmul reductions below.
    row = jax.lax.broadcasted_iota(jnp.int32, (tm, 1), 0)
    d = jnp.where(pl.program_id(0) * tm + row < total_tokens, d, 0.0)
    sp = jnp.maximum(d, 0.0) + jnp.log1p(jnp.exp(-jnp.abs(d)))         # stable softplus (EUP)

    tgt = t_ref[0]                                                     # (1, tm) int32, lane-dense
    active = (tgt > 0).astype(jnp.float32)                             # padded rows have target 0
    cls1 = (tgt > 1).astype(jnp.float32)                               # binary target == 1

    # Masked sums via two tiny row @ column dots: the MXU does the lane<->sublane combine,
    # so no cross-lane relayout of targets or logits is needed.
    loss_sum = (jnp.dot(active, sp, preferred_element_type=jnp.float32)
                - jnp.dot(cls1, d, preferred_element_type=jnp.float32))[0, 0]
    cnt_sum = jnp.sum(active)

    # One lane-dense row per tile: lane 0 = sum of active per-token losses, lane 1 = active count.
    lane = jax.lax.broadcasted_iota(jnp.int32, part_ref.shape, 2)
    part_ref[...] = jnp.where(lane == 0, loss_sum, jnp.where(lane == 1, cnt_sum, 0.0))


def _round_up(x, m):
    return (x + m - 1) // m * m


def _vmem_budget_bytes():
    """Usable VMEM budget: chip capacity (64 MiB v7x / 128 MiB v5e,v6e) minus headroom."""
    try:
        cap = int(pltpu.get_tpu_info().vmem_capacity_bytes)
    except Exception:
        cap = 64 * 1024 * 1024                      # conservative (v7x-sized) fallback
    return max(cap - 16 * 1024 * 1024, 32 * 1024 * 1024)


def _pick_tm(T, H, itemsize, vmem_budget_bytes, tm_cap=1024):
    """Largest token tile fitting VMEM, accounting for 8x128 tile padding of every buffer."""
    lanes_h = _round_up(H, 128)
    # double-buffered per-token bytes: hidden in + logits out (2 -> 128 lanes) + lane-dense target
    per_tok = 2 * (lanes_h * itemsize + 128 * itemsize + 8 * 4)
    # resident weight / bias / per-tile-partial buffers (double buffered, lane/sublane padded)
    fixed = 2 * _round_up(H, 8) * 128 * itemsize + 2 * 8 * 128 * 4 * 2
    tm = max((vmem_budget_bytes - fixed) // per_tok, 8)
    tm = min(tm, tm_cap)
    # Keep >=2 (usually >=8) grid tiles so v7x's two TensorCores both get work, but never
    # shrink below 256 tokens/tile (fixed ~0.35us per-step overhead dominates below that).
    if T >= 2 * 256:
        tm = min(tm, max(256, _round_up(-(-T // 8), 128)))
    tm = min(tm, _round_up(T, 16))
    if tm >= 128:
        tm = (tm // 128) * 128
    elif tm >= 16:
        tm = (tm // 16) * 16                        # bf16 sublane packing (v5e)
    else:
        tm = max(8, (tm // 8) * 8)
    return int(tm)


@functools.partial(jax.jit, static_argnames=("tm",))
def transformer_head(hidden_state, target, w, b, *, tm=None):
    """hidden_state: (B,S,H), target: (B,S) int, w: (H,2), b: (2,)."""
    B, S, H = hidden_state.shape
    T = B * S
    dtype = hidden_state.dtype
    budget = _vmem_budget_bytes()
    if tm is None:
        tm = _pick_tm(T, H, jnp.dtype(dtype).itemsize, budget)

    num_tiles = -(-T // tm)
    Tpad = num_tiles * tm

    h2d = hidden_state.reshape(T, H)                 # free view: no pad, no cast, no copy
    t1d = target.reshape(T).astype(jnp.int32)
    if Tpad != T:                                    # pad only the tiny target vector (T*4 bytes)
        t1d = jnp.pad(t1d, (0, Tpad - T))            # padded rows -> target 0 (inactive)
    t3d = t1d.reshape(num_tiles, 1, tm)              # lane-dense target blocks

    w2d = w.astype(dtype)                            # keep MXU operands in the model dtype
    b2d = b.reshape(1, 2).astype(jnp.float32)

    logits, parts = pl.pallas_call(
        functools.partial(head_kernel, total_tokens=T),
        out_shape=(
            jax.ShapeDtypeStruct((T, 2), dtype),
            jax.ShapeDtypeStruct((num_tiles, 1, 128), jnp.float32),
        ),
        grid_spec=pltpu.PrefetchScalarGridSpec(
            num_scalar_prefetch=0,
            grid=(num_tiles,),
            in_specs=[
                pl.BlockSpec((tm, H), lambda i: (i, 0)),
                pl.BlockSpec((1, 1, tm), lambda i: (i, 0, 0)),
                pl.BlockSpec((H, 2), lambda i: (0, 0)),
                pl.BlockSpec((1, 2), lambda i: (0, 0)),
            ],
            out_specs=[
                pl.BlockSpec((tm, 2), lambda i: (i, 0)),
                pl.BlockSpec((1, 1, 128), lambda i: (i, 0, 0)),
            ],
        ),
        compiler_params=pltpu.CompilerParams(
            dimension_semantics=("parallel",),       # token tiles are fully independent
            vmem_limit_bytes=int(budget),            # derived from actual chip capacity
        ),
    )(h2d, t3d, w2d, b2d)

    # Tiny epilogue over num_tiles scalars: mean over active tokens.
    # NOTE: all-inactive targets give NaN (0/0), matching PyTorch CrossEntropyLoss on empty input.
    loss = jnp.sum(parts[:, 0, 0]) / jnp.sum(parts[:, 0, 1])
    return loss, logits.reshape(B, S, 2)


def reference(hidden_state, target, w, b):
    B, S, H = hidden_state.shape
    x = jnp.maximum(hidden_state, 0).reshape(B * S, H)
    logits = jnp.dot(x, w.astype(hidden_state.dtype),
                     preferred_element_type=jnp.float32) + b.astype(jnp.float32)
    t = target.reshape(-1)
    active = t > 0
    tgt = jnp.clip(t - 1, 0, 1)
    lse = jax.nn.logsumexp(logits, axis=-1)
    picked = jnp.take_along_axis(logits, tgt[:, None], axis=1)[:, 0]
    per = jnp.where(active, lse - picked, 0.0)
    loss = per.sum() / active.sum()
    return loss, logits.astype(hidden_state.dtype).reshape(B, S, 2)


if __name__ == "__main__":
    B, S, H = 2, 8, 32          # small shapes: batch=2, seq=8, n_embd=32
    key = jax.random.PRNGKey(0)
    k_h, k_t, k_w, k_b = jax.random.split(key, 4)

    hidden_state = jax.random.normal(k_h, (B, S, H), jnp.float32)
    # target values: 0 = padding (inactive), 1 -> class 0, 2 -> class 1
    target = jax.random.randint(k_t, (B, S), 0, 3, dtype=jnp.int32)

    # deterministic parameter init for nn.Linear(n_embd, 2, bias=True)
    w = jax.random.normal(k_w, (H, 2), jnp.float32) * 0.02
    b = jax.random.normal(k_b, (2,), jnp.float32) * 0.02

    # float32 path — strict check against the pure-JAX reference
    loss, logits = transformer_head(hidden_state, target, w, b)
    jax.block_until_ready((loss, logits))
    loss_ref, logits_ref = reference(hidden_state, target, w, b)
    np.testing.assert_allclose(np.asarray(logits), np.asarray(logits_ref), rtol=1e-5, atol=1e-5)
    np.testing.assert_allclose(np.asarray(loss), np.asarray(loss_ref), rtol=1e-5, atol=1e-5)

    # bf16 path (model-native dtype end-to-end; halves HBM read traffic on the hidden state)
    hs16, w16 = hidden_state.astype(jnp.bfloat16), w.astype(jnp.bfloat16)
    loss16, logits16 = transformer_head(hs16, target, w16, b)
    jax.block_until_ready((loss16, logits16))
    loss16_ref, logits16_ref = reference(hs16, target, w16, b)
    np.testing.assert_allclose(np.asarray(logits16.astype(jnp.float32)),
                               np.asarray(logits16_ref.astype(jnp.float32)),
                               rtol=5e-2, atol=5e-2)
    np.testing.assert_allclose(float(loss16), float(loss16_ref), rtol=5e-2, atol=5e-2)

    print("KERNEL_OK")
</pallas_src>

<mosaic_0001>
module attributes {stable_mosaic.version = 11 : i64} {
  func.func @head_kernel(%arg0: i32, %arg1: memref<16x32xf32, #tpu.memory_space<vmem>>, %arg2: memref<1x1x16xi32, #tpu.memory_space<vmem>>, %arg3: memref<32x2xf32, #tpu.memory_space<vmem>>, %arg4: memref<1x2xf32, #tpu.memory_space<vmem>>, %arg5: memref<16x2xf32, #tpu.memory_space<vmem>>, %arg6: memref<1x1x128xf32, #tpu.memory_space<vmem>>) attributes {dimension_semantics = [#tpu.dimension_semantics<parallel>], iteration_bounds = array<i64: 1>, scalar_prefetch = 0 : i64, scratch_operands = 0 : i64, tpu.core_type = #tpu.core_type<tc>, window_params = [{transform_indices = @transform_0, window_bounds = array<i64: 16, 32>}, {transform_indices = @transform_1, window_bounds = array<i64: 1, 1, 16>}, {pipeline_mode = #tpu.pipeline_mode<synchronous>, transform_indices = @transform_2, window_bounds = array<i64: 32, 2>}, {pipeline_mode = #tpu.pipeline_mode<synchronous>, transform_indices = @transform_3, window_bounds = array<i64: 1, 2>}, {transform_indices = @transform_4, window_bounds = array<i64: 16, 2>}, {transform_indices = @transform_5, window_bounds = array<i64: 1, 1, 128>}]} {
    %c0 = arith.constant 0 : index
    %c0_0 = arith.constant 0 : index
    %0 = vector.load %arg1[%c0, %c0_0] : memref<16x32xf32, #tpu.memory_space<vmem>>, vector<16x32xf32>
    %cst = arith.constant 0.000000e+00 : f32
    %1 = vector.broadcast %cst : f32 to vector<16x32xf32>
    %2 = arith.maximumf %0, %1 : vector<16x32xf32>
    %c0_1 = arith.constant 0 : index
    %c0_2 = arith.constant 0 : index
    %3 = vector.load %arg3[%c0_1, %c0_2] : memref<32x2xf32, #tpu.memory_space<vmem>>, vector<32x2xf32>
    %cst_3 = arith.constant dense<0.000000e+00> : vector<16x2xf32>
    %4 = tpu.matmul %2, %3, %cst_3 {dimension_numbers = #tpu.dot_dimension_numbers<[1], [0], [0], [1], [0, 0, 1, 1], [], []>} : vector<16x32xf32>, vector<32x2xf32>, vector<16x2xf32> -> vector<16x2xf32>
    %c0_4 = arith.constant 0 : index
    %c0_5 = arith.constant 0 : index
    %5 = vector.load %arg4[%c0_4, %c0_5] : memref<1x2xf32, #tpu.memory_space<vmem>>, vector<1x2xf32>
    %6 = vector.broadcast %5 : vector<1x2xf32> to vector<16x2xf32>
    %7 = arith.addf %4, %6 : vector<16x2xf32>
    %c0_6 = arith.constant 0 : index
    %c0_7 = arith.constant 0 : index
    %8 = vector.load %arg5[%c0_6, %c0_7] : memref<16x2xf32, #tpu.memory_space<vmem>>, vector<16x2xf32>
    tpu.vector_store %arg5[%c0_6, %c0_7], %7 {strides = array<i32>} : memref<16x2xf32, #tpu.memory_space<vmem>>, vector<16x2xf32>,
    %9 = vector.extract_strided_slice %7 {offsets = [0, 1], sizes = [16, 1], strides = [1, 1]} : vector<16x2xf32> to vector<16x1xf32>
    %10 = vector.extract_strided_slice %7 {offsets = [0, 0], sizes = [16, 1], strides = [1, 1]} : vector<16x2xf32> to vector<16x1xf32>
    %11 = arith.subf %9, %10 : vector<16x1xf32>
    %12 = tpu.iota {dimensions = array<i32: 0>} : vector<16x1xi32>
    %c16_i32 = arith.constant 16 : i32
    %13 = arith.muli %arg0, %c16_i32 : i32
    %14 = vector.broadcast %13 : i32 to vector<16x1xi32>
    %15 = arith.addi %14, %12 : vector<16x1xi32>
    %c16_i32_8 = arith.constant 16 : i32
    %16 = vector.broadcast %c16_i32_8 : i32 to vector<16x1xi32>
    %17 = arith.cmpi slt, %15, %16 : vector<16x1xi32>
    %cst_9 = arith.constant 0.000000e+00 : f32
    %18 = vector.broadcast %cst_9 : f32 to vector<16x1xf32>
    %19 = arith.select %17, %11, %18 : vector<16x1xi1>, vector<16x1xf32>
    %cst_10 = arith.constant 0.000000e+00 : f32
    %20 = vector.broadcast %cst_10 : f32 to vector<16x1xf32>
    %21 = arith.maximumf %19, %20 : vector<16x1xf32>
    %22 = math.absf %19 : vector<16x1xf32>
    %cst_11 = arith.constant 0.000000e+00 : f32
    %23 = vector.broadcast %cst_11 : f32 to vector<16x1xf32>
    %24 = arith.subf %23, %22 : vector<16x1xf32>
    %25 = math.exp %24 : vector<16x1xf32>
    %26 = math.log1p %25 : vector<16x1xf32>
    %27 = arith.addf %21, %26 : vector<16x1xf32>
    %c0_12 = arith.constant 0 : index
    %c0_13 = arith.constant 0 : index
    %c0_14 = arith.constant 0 : index
    %28 = vector.load %arg2[%c0_12, %c0_13, %c0_14] : memref<1x1x16xi32, #tpu.memory_space<vmem>>, vector<1x1x16xi32>
    %29 = vector.shape_cast %28 : vector<1x1x16xi32> to vector<1x16xi32>
    %c0_i32 = arith.constant 0 : i32
    %30 = vector.broadcast %c0_i32 : i32 to vector<1x16xi32>
    %31 = arith.cmpi sgt, %29, %30 : vector<1x16xi32>
    %32 = arith.extui %31 : vector<1x16xi1> to vector<1x16xi32>
    %33 = arith.sitofp %32 : vector<1x16xi32> to vector<1x16xf32>
    %c1_i32 = arith.constant 1 : i32
    %34 = vector.broadcast %c1_i32 : i32 to vector<1x16xi32>
    %35 = arith.cmpi sgt, %29, %34 : vector<1x16xi32>
    %36 = arith.extui %35 : vector<1x16xi1> to vector<1x16xi32>
    %37 = arith.sitofp %36 : vector<1x16xi32> to vector<1x16xf32>
    %cst_15 = arith.constant dense<0.000000e+00> : vector<1x1xf32>
    %38 = tpu.matmul %33, %27, %cst_15 {dimension_numbers = #tpu.dot_dimension_numbers<[1], [0], [0], [1], [0, 0, 1, 1], [], []>} : vector<1x16xf32>, vector<16x1xf32>, vector<1x1xf32> -> vector<1x1xf32>
    %cst_16 = arith.constant dense<0.000000e+00> : vector<1x1xf32>
    %39 = tpu.matmul %37, %19, %cst_16 {dimension_numbers = #tpu.dot_dimension_numbers<[1], [0], [0], [1], [0, 0, 1, 1], [], []>} : vector<1x16xf32>, vector<16x1xf32>, vector<1x1xf32> -> vector<1x1xf32>
    %40 = arith.subf %38, %39 : vector<1x1xf32>
    %41 = vector.extract %40[0, 0] : f32 from vector<1x1xf32>
    %42 = vector.shape_cast %33 : vector<1x16xf32> to vector<1x1x16xf32>
    %cst_17 = arith.constant dense<0.000000e+00> : vector<1xf32>
    %43 = vector.multi_reduction <add>, %42, %cst_17 [1, 2] : vector<1x1x16xf32> to vector<1xf32>
    %44 = vector.shape_cast %43 : vector<1xf32> to vector<1x1x1xf32>
    %45 = vector.extract %44[0, 0, 0] : f32 from vector<1x1x1xf32>
    %46 = tpu.iota {dimensions = array<i32: 2>} : vector<1x1x128xi32>
    %c0_i32_18 = arith.constant 0 : i32
    %47 = vector.broadcast %c0_i32_18 : i32 to vector<1x1x128xi32>
    %48 = arith.cmpi eq, %46, %47 : vector<1x1x128xi32>
    %c1_i32_19 = arith.constant 1 : i32
    %49 = vector.broadcast %c1_i32_19 : i32 to vector<1x1x128xi32>
    %50 = arith.cmpi eq, %46, %49 : vector<1x1x128xi32>
    %cst_20 = arith.constant 0.000000e+00 : f32
    %51 = vector.broadcast %45 : f32 to vector<1x1x128xf32>
    %52 = vector.broadcast %cst_20 : f32 to vector<1x1x128xf32>
    %53 = arith.select %50, %51, %52 : vector<1x1x128xi1>, vector<1x1x128xf32>
    %54 = vector.broadcast %41 : f32 to vector<1x1x128xf32>
    %55 = arith.select %48, %54, %53 : vector<1x1x128xi1>, vector<1x1x128xf32>
    %c0_21 = arith.constant 0 : index
    %c0_22 = arith.constant 0 : index
    %c0_23 = arith.constant 0 : index
    %56 = vector.load %arg6[%c0_21, %c0_22, %c0_23] : memref<1x1x128xf32, #tpu.memory_space<vmem>>, vector<1x1x128xf32>
    tpu.vector_store %arg6[%c0_21, %c0_22, %c0_23], %55 {strides = array<i32>} : memref<1x1x128xf32, #tpu.memory_space<vmem>>, vector<1x1x128xf32>,
    return
  }
  func.func @transform_0(%arg0: i32) -> (i32, i32) {
    %c0_i32 = arith.constant 0 : i32
    %c0_i32_0 = arith.constant 0 : i32
    return %arg0, %c0_i32 : i32, i32
  }
  func.func @transform_1(%arg0: i32) -> (i32, i32, i32) {
    %c0_i32 = arith.constant 0 : i32
    %c0_i32_0 = arith.constant 0 : i32
    %c0_i32_1 = arith.constant 0 : i32
    return %arg0, %c0_i32, %c0_i32_0 : i32, i32, i32
  }
  func.func @transform_2(%arg0: i32) -> (i32, i32) {
    %c0_i32 = arith.constant 0 : i32
    %c0_i32_0 = arith.constant 0 : i32
    %c0_i32_1 = arith.constant 0 : i32
    return %c0_i32, %c0_i32_0 : i32, i32
  }
  func.func @transform_3(%arg0: i32) -> (i32, i32) {
    %c0_i32 = arith.constant 0 : i32
    %c0_i32_0 = arith.constant 0 : i32
    %c0_i32_1 = arith.constant 0 : i32
    return %c0_i32, %c0_i32_0 : i32, i32
  }
  func.func @transform_4(%arg0: i32) -> (i32, i32) {
    %c0_i32 = arith.constant 0 : i32
    %c0_i32_0 = arith.constant 0 : i32
    return %arg0, %c0_i32 : i32, i32
  }
  func.func @transform_5(%arg0: i32) -> (i32, i32, i32) {
    %c0_i32 = arith.constant 0 : i32
    %c0_i32_0 = arith.constant 0 : i32
    %c0_i32_1 = arith.constant 0 : i32
    return %arg0, %c0_i32, %c0_i32_0 : i32, i32, i32
  }
}

</mosaic_0001>

<llo_original>
// kernel: transformer_head.1
$region0: #{transformer_head.1}
  #allocation0 [shape = 'u32[]', space=smem, size = 0x4, offset = 0x4, fixed_abs, tag = 'smem constant byte address 0x4 - core index']
  #allocation1 [shape = 'u32[144,128]{1,0:T(1,128)}', space=vmem, size = 0x12000, scoped, tag = 'internal scratch']
  %s0 = inlined_call_operand.vmem [shape: f32[16,32], index: 0, kind: input, shape index: {}]
  %s1 = inlined_call_operand.vmem [shape: s32[1,1,16], index: 1, kind: input, shape index: {}]
  %s2 = inlined_call_operand.vmem [shape: f32[32,2], index: 2, kind: input, shape index: {}]
  %s3 = inlined_call_operand.vmem [shape: f32[1,2], index: 3, kind: input, shape index: {}]
  %s4 = inlined_call_operand.vmem [shape: f32[16,2], index: 4, kind: output, shape index: {0}]
  %s5 = inlined_call_operand.vmem [shape: f32[1,1,128], index: 5, kind: output, shape index: {1}]
  %6 = xla_tuple %s4, %s5
  %s7 = sld [smem:[#allocation0]]
  $region34: #{transformer_head.1} parent=0
    _
  %s9 = ssub.s32 1, %s7
  %s10 = scalar_select 0, %s9, %s7
  // Predicated region
  $region2: #{transformer_head.1} parent=0 // pred_check
    _
  $region3: #{transformer_head.1} parent=0 // pred_check_branch
    %12 = sbr.rel (0) target = $region5
  $region4: #{transformer_head.1} parent=0 // pred_region
    _
  $region5: #{transformer_head.1} parent=0 // pred_fallthru
    _
  // Predicated region
  $region6: #{transformer_head.1} parent=0 // pred_check
    _
  $region7: #{transformer_head.1} parent=0 // pred_check_branch
    %14 = sbr.rel (0) target = $region9
  $region8: #{transformer_head.1} parent=0 // pred_region
    _
  $region9: #{transformer_head.1} parent=0 // pred_fallthru
    _
  // Predicated region
  $region10: #{transformer_head.1} parent=0 // pred_check
    _
  $region11: #{transformer_head.1} parent=0 // pred_check_branch
    %16 = sbr.rel (0) target = $region13
  $region12: #{transformer_head.1} parent=0 // pred_region
    _
  $region13: #{transformer_head.1} parent=0 // pred_fallthru
    _
  // Predicated region
  $region14: #{transformer_head.1} parent=0 // pred_check
    _
  $region15: #{transformer_head.1} parent=0 // pred_check_branch
    %18 = sbr.rel (0) target = $region17
  $region16: #{transformer_head.1} parent=0 // pred_region
    _
  $region17: #{transformer_head.1} parent=0 // pred_fallthru
    _
  %v19 = vld [vmem:[%s0] sm:$0xff]
  %v20 = vld [vmem:[%s0 + $0x8] sm:$0xff]
  %v21 = vmax.f32 %v19, 0.0
  %v22 = vmax.f32 %v20, 0.0
  %v23 = vld [vmem:[%s2] sm:$0xff]
  %v24 = vld [vmem:[%s2 + $0x8] sm:$0xff]
  %v25 = vld [vmem:[%s2 + $0x10] sm:$0xff]
  %v26 = vld [vmem:[%s2 + $0x18] sm:$0xff]
  %v27 = vld [vmem:[%s3] sm:$0x1]
  %v29 = vlaneseq
  %v30 = vshrl.u32 %v29, 7
  %v31 = vsub.s32 0, %v30
  %v32 = vrot.slane %v27, %v31
  %vm34 = vcmask 261120
  %v36 = vsel %vm34, %v21, 0
  %v39 = vsel %vm34, %v22, 0
  %41 = vmatprep.subr.mxu0 0.0
  %42 = vmatpush1.msra.mxu0 0.0
  %43 = vmatprep.subr.mxu0 0.0
  %44 = vmatpush1.msra.mxu0 0.0
  %45 = vmatprep.subr.mxu0 0.0
  %46 = vmatpush1.msra.mxu0 0.0
  %47 = vmatprep.subr.mxu0 0.0
  %48 = vmatpush1.msra.mxu0 0.0
  %49 = vmatprep.subr.mxu0 0.0
  %50 = vmatpush1.msra.mxu0 0.0
  %51 = vmatprep.subr.mxu0 0.0
  %52 = vmatpush1.msra.mxu0 0.0
  %53 = vmatprep.subr.mxu0 0.0
  %54 = vmatpush1.msra.mxu0 0.0
  %55 = vmatprep.subr.mxu0 0.0
  %56 = vmatpush1.msra.mxu0 0.0
  %57 = vmatprep.subr.mxu0 0.0
  %58 = vmatpush1.msra.mxu0 0.0
  %59 = vmatprep.subr.mxu0 0.0
  %60 = vmatpush1.msra.mxu0 0.0
  %61 = vmatprep.subr.mxu0 0.0
  %62 = vmatpush1.msra.mxu0 0.0
  %63 = vmatprep.subr.mxu0 0.0
  %64 = vmatpush1.msra.mxu0 0.0
  %65 = vmatprep.subr.mxu0 0.0
  %66 = vmatpush1.msra.mxu0 %v26
  %67 = vmatprep.subr.mxu0 0.0
  %68 = vmatpush1.msra.mxu0 %v25
  %69 = vmatprep.subr.mxu0 0.0
  %70 = vmatpush1.msra.mxu0 %v24
  %71 = vmatprep.subr.mxu0 0.0
  %72 = vmatpush1.msra.mxu0 %v23
  %73 = vmatprep.subr.mxu0 0.0
  %74 = vmatpush2.msra.mxu0 0.0
  %75 = vmatprep.subr.mxu0 0.0
  %76 = vmatpush2.msra.mxu0 0.0
  %77 = vmatprep.subr.mxu0 0.0
  %78 = vmatpush2.msra.mxu0 0.0
  %79 = vmatprep.subr.mxu0 0.0
  %80 = vmatpush2.msra.mxu0 0.0
  %81 = vmatprep.subr.mxu0 0.0
  %82 = vmatpush2.msra.mxu0 0.0
  %83 = vmatprep.subr.mxu0 0.0
  %84 = vmatpush2.msra.mxu0 0.0
  %85 = vmatprep.subr.mxu0 0.0
  %86 = vmatpush2.msra.mxu0 0.0
  %87 = vmatprep.subr.mxu0 0.0
  %88 = vmatpush2.msra.mxu0 0.0
  %89 = vmatprep.subr.mxu0 0.0
  %90 = vmatpush2.msra.mxu0 0.0
  %91 = vmatprep.subr.mxu0 0.0
  %92 = vmatpush2.msra.mxu0 0.0
  %93 = vmatprep.subr.mxu0 0.0
  %94 = vmatpush2.msra.mxu0 0.0
  %95 = vmatprep.subr.mxu0 0.0
  %96 = vmatpush2.msra.mxu0 0.0
  %97 = vmatprep.subr.mxu0 0.0
  %98 = vmatpush2.msra.mxu0 0.0
  %99 = vmatprep.subr.mxu0 0.0
  %100 = vmatpush2.msra.mxu0 0.0
  %101 = vmatprep.subr.mxu0 0.0
  %102 = vmatpush2.msra.mxu0 0.0
  %103 = vmatprep.subr.mxu0 0.0
  %104 = vmatpush2.msra.mxu0 0.0
  %105 = vmatprep.mubr.f32.mxu0 0.0
  %106 = vmatmul.mubr.f32.gmra.mxu0 %v36
  %v107 = vpop.f32.mrf.mxu0
  %v108 = vadd.f32 %v32, %v107
  %v109 = vpop.f32.mrf.mxu0
  %110 = vmatprep.mubr.f32.mxu0 0.0
  %111 = vmatmul.mubr.f32.gmra.mxu0 %v39
  %v112 = vpop.f32.mrf.mxu0
  %v113 = vadd.f32 %v32, %v112
  %v114 = vpop.f32.mrf.mxu0
  %115 = vdwg.mxu0
  %vm116 = vcmask 15360
  %117 = vst.msk [vmem:[%s4] sm:$0xff] %vm116, %v108
  %118 = vst.msk [vmem:[%s4 + $0x8] sm:$0xff] %vm116, %v113
  %121 = vrot.lane.b32.xlu0 %v108, 1
  %v122 = vpop.permute.xlu0 %121
  %123 = vrot.lane.b32.xlu0 %v113, 1
  %v124 = vpop.permute.xlu0 %123
  %v127 = vsub.f32 %v108, %v122
  %v128 = vsub.f32 %v113, %v124
  %v129 = vlaneseq
  %v130 = vshrl.u32 %v129, 7
  %v131 = vadd.s32 %v130, 8
  %s132 = smul.u32 0, 16
  %v133 = vstv %s132
  %v134 = vadd.s32 %v133, %v130
  %v135 = vadd.s32 %v133, %v131
  %vm136 = vcmp.lt.s32.totalorder %v134, 16
  %vm137 = vcmp.lt.s32.totalorder %v135, 16
  %v138 = vsel %vm136, %v127, 0.0
  %v139 = vsel %vm137, %v128, 0.0
  %v140 = vmax.f32 %v138, 0.0
  %v141 = vmax.f32 %v139, 0.0
  %v142 = vand.u32 2147483647, %v138
  %v143 = vand.u32 2147483647, %v139
  %v144 = vsub.f32 0.0, %v142
  %v145 = vsub.f32 0.0, %v143
  %v146 = vmul.f32 %v144, 1.442695
  %v147 = vpow.pop %v146
  %v148 = vmul.f32 %v145, 1.442695
  %v149 = vpow.pop %v148
  %v150 = vadd.f32 %v147, 1.0
  %v151 = vlog2.pop %v150
  %v152 = vmul.f32 %v151, 0.6931472
  %v153 = vmul.f32 -0.5, %v147
  %v154 = vadd.f32 %v153, 1.0
  %v155 = vmul.f32 %v154, %v147
  %v156 = vand.u32 2147483647, %v147
  %vm157 = vcmp.lt.f32.partialorder %v156, 0.0004427343
  %v158 = vsel %vm157, %v155, %v152
  %v159 = vadd.f32 %v149, 1.0
  %v160 = vlog2.pop %v159
  %v161 = vmul.f32 %v160, 0.6931472
  %v162 = vmul.f32 -0.5, %v149
  %v163 = vadd.f32 %v162, 1.0
  %v164 = vmul.f32 %v163, %v149
  %v165 = vand.u32 2147483647, %v149
  %vm166 = vcmp.lt.f32.partialorder %v165, 0.0004427343
  %v167 = vsel %vm166, %v164, %v161
  %v168 = vadd.f32 %v140, %v158
  %v169 = vadd.f32 %v141, %v167
  %v170 = vld [vmem:[%s1] sm:$0x1]
  %vm171 = vcmp.gt.s32.totalorder %v170, 0
  %v172 = vsel %vm171, 1, 0
  %v173 = vcvt.s32.f32 %v172
  %vm174 = vcmp.gt.s32.totalorder %v170, 1
  %v175 = vsel %vm174, 1, 0
  %v176 = vcvt.s32.f32 %v175
  %179 = vrot.lane.b32.xlu0 %v168, 127
  %v180 = vpop.permute.xlu0 %179
  %181 = vrot.lane.b32.xlu0 %v169, 127
  %v182 = vpop.permute.xlu0 %181
  %vm185 = vcmask 130048
  %v187 = vsel %vm185, %v173, 0
  %189 = vmatprep.subr.mxu0 0.0
  %190 = vmatpush1.msra.mxu0 0.0
  %191 = vmatprep.subr.mxu0 0.0
  %192 = vmatpush1.msra.mxu0 0.0
  %193 = vmatprep.subr.mxu0 0.0
  %194 = vmatpush1.msra.mxu0 0.0
  %195 = vmatprep.subr.mxu0 0.0
  %196 = vmatpush1.msra.mxu0 0.0
  %197 = vmatprep.subr.mxu0 0.0
  %198 = vmatpush1.msra.mxu0 0.0
  %199 = vmatprep.subr.mxu0 0.0
  %200 = vmatpush1.msra.mxu0 0.0
  %201 = vmatprep.subr.mxu0 0.0
  %202 = vmatpush1.msra.mxu0 0.0
  %203 = vmatprep.subr.mxu0 0.0
  %204 = vmatpush1.msra.mxu0 0.0
  %205 = vmatprep.subr.mxu0 0.0
  %206 = vmatpush1.msra.mxu0 0.0
  %207 = vmatprep.subr.mxu0 0.0
  %208 = vmatpush1.msra.mxu0 0.0
  %209 = vmatprep.subr.mxu0 0.0
  %210 = vmatpush1.msra.mxu0 0.0
  %211 = vmatprep.subr.mxu0 0.0
  %212 = vmatpush1.msra.mxu0 0.0
  %213 = vmatprep.subr.mxu0 0.0
  %214 = vmatpush1.msra.mxu0 0.0
  %215 = vmatprep.subr.mxu0 0.0
  %216 = vmatpush1.msra.mxu0 0.0
  %217 = vmatprep.subr.mxu0 0.0
  %218 = vmatpush1.msra.mxu0 %v182
  %219 = vmatprep.subr.mxu0 0.0
  %220 = vmatpush1.msra.mxu0 %v180
  %221 = vmatprep.subr.mxu0 0.0
  %222 = vmatpush2.msra.mxu0 0.0
  %223 = vmatprep.subr.mxu0 0.0
  %224 = vmatpush2.msra.mxu0 0.0
  %225 = vmatprep.subr.mxu0 0.0
  %226 = vmatpush2.msra.mxu0 0.0
  %227 = vmatprep.subr.mxu0 0.0
  %228 = vmatpush2.msra.mxu0 0.0
  %229 = vmatprep.subr.mxu0 0.0
  %230 = vmatpush2.msra.mxu0 0.0
  %231 = vmatprep.subr.mxu0 0.0
  %232 = vmatpush2.msra.mxu0 0.0
  %233 = vmatprep.subr.mxu0 0.0
  %234 = vmatpush2.msra.mxu0 0.0
  %235 = vmatprep.subr.mxu0 0.0
  %236 = vmatpush2.msra.mxu0 0.0
  %237 = vmatprep.subr.mxu0 0.0
  %238 = vmatpush2.msra.mxu0 0.0
  %239 = vmatprep.subr.mxu0 0.0
  %240 = vmatpush2.msra.mxu0 0.0
  %241 = vmatprep.subr.mxu0 0.0
  %242 = vmatpush2.msra.mxu0 0.0
  %243 = vmatprep.subr.mxu0 0.0
  %244 = vmatpush2.msra.mxu0 0.0
  %245 = vmatprep.subr.mxu0 0.0
  %246 = vmatpush2.msra.mxu0 0.0
  %247 = vmatprep.subr.mxu0 0.0
  %248 = vmatpush2.msra.mxu0 0.0
  %249 = vmatprep.subr.mxu0 0.0
  %250 = vmatpush2.msra.mxu0 0.0
  %251 = vmatprep.subr.mxu0 0.0
  %252 = vmatpush2.msra.mxu0 0.0
  %253 = vmatprep.mubr.f32.mxu0 0.0
  %254 = vmatmul.mubr.f32.gmra.mxu0 %v187
  %v255 = vpop.f32.mrf.mxu0
  %v256 = vadd.f32 0.0, %v255
  %v257 = vpop.f32.mrf.mxu0
  %258 = vdwg.mxu0
  %261 = vrot.lane.b32.xlu0 %v138, 127
  %v262 = vpop.permute.xlu0 %261
  %263 = vrot.lane.b32.xlu0 %v139, 127
  %v264 = vpop.permute.xlu0 %263
  %v268 = vsel %vm185, %v176, 0
  %270 = vmatprep.subr.mxu0 0.0
  %271 = vmatpush1.msra.mxu0 0.0
  %272 = vmatprep.subr.mxu0 0.0
  %273 = vmatpush1.msra.mxu0 0.0
  %274 = vmatprep.subr.mxu0 0.0
  %275 = vmatpush1.msra.mxu0 0.0
  %276 = vmatprep.subr.mxu0 0.0
  %277 = vmatpush1.msra.mxu0 0.0
  %278 = vmatprep.subr.mxu0 0.0
  %279 = vmatpush1.msra.mxu0 0.0
  %280 = vmatprep.subr.mxu0 0.0
  %281 = vmatpush1.msra.mxu0 0.0
  %282 = vmatprep.subr.mxu0 0.0
  %283 = vmatpush1.msra.mxu0 0.0
  %284 = vmatprep.subr.mxu0 0.0
  %285 = vmatpush1.msra.mxu0 0.0
  %286 = vmatprep.subr.mxu0 0.0
  %287 = vmatpush1.msra.mxu0 0.0
  %288 = vmatprep.subr.mxu0 0.0
  %289 = vmatpush1.msra.mxu0 0.0
  %290 = vmatprep.subr.mxu0 0.0
  %291 = vmatpush1.msra.mxu0 0.0
  %292 = vmatprep.subr.mxu0 0.0
  %293 = vmatpush1.msra.mxu0 0.0
  %294 = vmatprep.subr.mxu0 0.0
  %295 = vmatpush1.msra.mxu0 0.0
  %296 = vmatprep.subr.mxu0 0.0
  %297 = vmatpush1.msra.mxu0 0.0
  %298 = vmatprep.subr.mxu0 0.0
  %299 = vmatpush1.msra.mxu0 %v264
  %300 = vmatprep.subr.mxu0 0.0
  %301 = vmatpush1.msra.mxu0 %v262
  %302 = vmatprep.subr.mxu0 0.0
  %303 = vmatpush2.msra.mxu0 0.0
  %304 = vmatprep.subr.mxu0 0.0
  %305 = vmatpush2.msra.mxu0 0.0
  %306 = vmatprep.subr.mxu0 0.0
  %307 = vmatpush2.msra.mxu0 0.0
  %308 = vmatprep.subr.mxu0 0.0
  %309 = vmatpush2.msra.mxu0 0.0
  %310 = vmatprep.subr.mxu0 0.0
  %311 = vmatpush2.msra.mxu0 0.0
  %312 = vmatprep.subr.mxu0 0.0
  %313 = vmatpush2.msra.mxu0 0.0
  %314 = vmatprep.subr.mxu0 0.0
  %315 = vmatpush2.msra.mxu0 0.0
  %316 = vmatprep.subr.mxu0 0.0
  %317 = vmatpush2.msra.mxu0 0.0
  %318 = vmatprep.subr.mxu0 0.0
  %319 = vmatpush2.msra.mxu0 0.0
  %320 = vmatprep.subr.mxu0 0.0
  %321 = vmatpush2.msra.mxu0 0.0
  %322 = vmatprep.subr.mxu0 0.0
  %323 = vmatpush2.msra.mxu0 0.0
  %324 = vmatprep.subr.mxu0 0.0
  %325 = vmatpush2.msra.mxu0 0.0
  %326 = vmatprep.subr.mxu0 0.0
  %327 = vmatpush2.msra.mxu0 0.0
  %328 = vmatprep.subr.mxu0 0.0
  %329 = vmatpush2.msra.mxu0 0.0
  %330 = vmatprep.subr.mxu0 0.0
  %331 = vmatpush2.msra.mxu0 0.0
  %332 = vmatprep.subr.mxu0 0.0
  %333 = vmatpush2.msra.mxu0 0.0
  %334 = vmatprep.mubr.f32.mxu0 0.0
  %335 = vmatmul.mubr.f32.gmra.mxu0 %v268
  %v336 = vpop.f32.mrf.mxu0
  %v337 = vadd.f32 0.0, %v336
  %v338 = vpop.f32.mrf.mxu0
  %339 = vdwg.mxu0
  %v340 = vsub.f32 %v256, %v337
  %s341 = vtos %v340
  %vm342 = vcmask 122880
  %v343 = vsel %vm342, %v173, 0.0
  %344 = vadd.xlane.f32.xlu0 %v343
  %v345 = vpop.xlane.xlu0 %344
  %v346 = vrot.slane %v345, 4
  %v347 = vadd.f32 %v345, %v346
  %v348 = vrot.slane %v347, 2
  %v349 = vadd.f32 %v347, %v348
  %v350 = vrot.slane %v349, 1
  %v351 = vadd.f32 %v349, %v350
  %s352 = vtos %v351
  %v353 = vlaneseq
  %v354 = vand.u32 %v353, 127
  %vm355 = vcmp.eq.s32.totalorder %v354, 0
  %vm356 = vcmp.eq.s32.totalorder %v354, 1
  %v357 = vstv %s352
  %v358 = vsel %vm356, %v357, 0.0
  %v359 = vstv %s341
  %v360 = vsel %vm355, %v359, %v358
  %361 = vst [vmem:[%s5] sm:$0x1] %v360
  // Predicated region
  $region18: #{transformer_head.1} parent=0 // pred_check
    _
  $region19: #{transformer_head.1} parent=0 // pred_check_branch
    %363 = sbr.rel (0) target = $region21
  $region20: #{transformer_head.1} parent=0 // pred_region
    _
  $region21: #{transformer_head.1} parent=0 // pred_fallthru
    _
  // Predicated region
  $region22: #{transformer_head.1} parent=0 // pred_check
    _
  $region23: #{transformer_head.1} parent=0 // pred_check_branch
    %365 = sbr.rel (0) target = $region25
  $region24: #{transformer_head.1} parent=0 // pred_region
    _
  $region25: #{transformer_head.1} parent=0 // pred_fallthru
    _
  // Predicated region
  $region26: #{transformer_head.1} parent=0 // pred_check
    _
  $region27: #{transformer_head.1} parent=0 // pred_check_branch
    %367 = sbr.rel (0) target = $region29
  $region28: #{transformer_head.1} parent=0 // pred_region
    _
  $region29: #{transformer_head.1} parent=0 // pred_fallthru
    _
  // Predicated region
  $region30: #{transformer_head.1} parent=0 // pred_check
    _
  $region31: #{transformer_head.1} parent=0 // pred_check_branch
    %369 = sbr.rel (0) target = $region33
  $region32: #{transformer_head.1} parent=0 // pred_region
    _
  $region33: #{transformer_head.1} parent=0 // pred_fallthru
    _

</llo_original>
